<compile_context>
chip_gen: v7x
topology: tpu7x:2x2x1
jax: 0.10.0
libtpu: 0.0.40
codegen_flags: <defaults>
</compile_context>

<pallas_src>
import jax
import jax.numpy as jnp
from jax.experimental import pallas as pl
from jax.experimental.pallas import tpu as pltpu

LOG_SIG_MAX = 2.0
LOG_SIG_MIN = -20.0


def _policy_kernel(state_ref, weight_ref, wa_ref, ba_ref, wls_ref, bls_ref,
                   mean_ref, log_std_ref):
    # Elementwise gate in f32 (inputs may be bf16 in HBM; cast is cheap VALU).
    gated = (state_ref[...].astype(jnp.float32)
             * weight_ref[...].astype(jnp.float32))                      # [TB, S]

    # Actor projection on the MXU: [TB, S] @ [S, A].
    x = jnp.dot(gated, wa_ref[...].astype(jnp.float32),
                preferred_element_type=jnp.float32)
    x = x + ba_ref[...].astype(jnp.float32)                              # [TB, A]

    # Numerically-stable softmax over the action dim.  Exact divide so each
    # row sums to 1 (downstream SAC log-prob/entropy math assumes it).
    m = jnp.max(x, axis=1, keepdims=True)
    e = jnp.exp(x - m)
    mean_ref[...] = (e / jnp.sum(e, axis=1, keepdims=True)).astype(mean_ref.dtype)

    # log_std head: tiny [TB, A] @ [A, A] GEMM + clamp (exact semantics; no
    # weight fusion, no lane slicing — kernel is HBM-bound so this is free).
    ls = jnp.dot(x, wls_ref[...].astype(jnp.float32),
                 preferred_element_type=jnp.float32)
    ls = ls + bls_ref[...].astype(jnp.float32)
    log_std_ref[...] = jnp.clip(ls, LOG_SIG_MIN, LOG_SIG_MAX).astype(log_std_ref.dtype)


def _round_up(x, m):
    return ((x + m - 1) // m) * m


def _pick_batch_tile(B, S, A, in_itemsize):
    # Target ~2 MiB of input bytes per grid step so the ~0.35 us per-step
    # pipeline overhead is well amortized (S=32/f32 -> TB = 8192).
    target_bytes = 2 << 20
    tb = max(8, target_bytes // (2 * S * in_itemsize))
    # Keep double-buffered input tiles + double-buffered f32 outputs inside
    # ~12 MiB, comfortably under every chip's default scoped VMEM (v5e 16 MiB).
    row_bytes = 2 * 2 * S * in_itemsize + 2 * 2 * A * 4
    tb = min(tb, max(8, (12 << 20) // row_bytes))
    # At least two grid steps when the batch allows, so the 'parallel' axis
    # can be sharded across both TensorCores on v7x.
    tb = min(tb, max(8, _round_up(pl.cdiv(B, 2), 8)))
    # Never larger than the (sublane-rounded) batch itself.
    tb = min(tb, max(8, _round_up(B, 8)))
    return max(8, (tb // 8) * 8)


def policy_based_forward(state, weight, w_actor, b_actor, w_ls, b_ls,
                         *, out_dtype=jnp.float32):
    B, S = state.shape
    A = w_actor.shape[1]
    b_actor = b_actor.reshape(1, A)
    b_ls = b_ls.reshape(1, A)

    TB = _pick_batch_tile(B, S, A, state.dtype.itemsize)
    # Ragged last block (if B % TB != 0): OOB rows are garbage on read and
    # dropped on write — no wrapper-side jnp.pad (saves an HBM pass).
    grid = (pl.cdiv(B, TB),)

    mean, log_std = pl.pallas_call(
        _policy_kernel,
        out_shape=(jax.ShapeDtypeStruct((B, A), out_dtype),
                   jax.ShapeDtypeStruct((B, A), out_dtype)),
        grid=grid,
        in_specs=[
            pl.BlockSpec((TB, S), lambda i: (i, 0)),    # state tile
            pl.BlockSpec((TB, S), lambda i: (i, 0)),    # weight tile
            # Parameters stay VMEM-resident across the whole grid
            # (constant block index -> fetched once).
            pl.BlockSpec((S, A), lambda i: (0, 0)),     # W_a
            pl.BlockSpec((1, A), lambda i: (0, 0)),     # b_a
            pl.BlockSpec((A, A), lambda i: (0, 0)),     # W_ls
            pl.BlockSpec((1, A), lambda i: (0, 0)),     # b_ls
        ],
        out_specs=(pl.BlockSpec((TB, A), lambda i: (i, 0)),   # action_mean
                   pl.BlockSpec((TB, A), lambda i: (i, 0))),  # action_log_std
        compiler_params=pltpu.CompilerParams(
            dimension_semantics=("parallel",),
        ),
    )(state, weight, w_actor, b_actor, w_ls, b_ls)
    return mean, log_std


def _reference(state, weight, w_actor, b_actor, w_ls, b_ls):
    x = (state * weight) @ w_actor + b_actor
    mean = jax.nn.softmax(x, axis=1)
    log_std = jnp.clip(x @ w_ls + b_ls, LOG_SIG_MIN, LOG_SIG_MAX)
    return mean, log_std


if __name__ == "__main__":
    B, S, A = 8, 32, 16  # batch, state_length, action_dim

    key = jax.random.PRNGKey(0)
    k_state, k_weight, k_wa, k_ba, k_wls, k_bls = jax.random.split(key, 6)

    state = jax.random.normal(k_state, (B, S), dtype=jnp.float32)
    weight = jax.random.normal(k_weight, (B, S), dtype=jnp.float32)

    # deterministic parameter init (synthetic; not loaded from a checkpoint)
    w_actor = jax.random.normal(k_wa, (S, A), dtype=jnp.float32) * 0.1
    b_actor = jax.random.normal(k_ba, (1, A), dtype=jnp.float32) * 0.1
    w_ls = jax.random.normal(k_wls, (A, A), dtype=jnp.float32) * 0.1
    b_ls = jax.random.normal(k_bls, (1, A), dtype=jnp.float32) * 0.1

    mean, log_std = jax.block_until_ready(
        policy_based_forward(state, weight, w_actor, b_actor, w_ls, b_ls)
    )

    ref_mean, ref_log_std = _reference(state, weight, w_actor, b_actor, w_ls, b_ls)
    assert jnp.allclose(mean, ref_mean, atol=1e-3, rtol=1e-3)
    assert jnp.allclose(log_std, ref_log_std, atol=1e-3, rtol=1e-3)
    # Exact softmax divide -> rows sum to 1 up to f32 rounding.
    assert jnp.allclose(jnp.sum(mean, axis=1), 1.0, atol=1e-3)

    print("KERNEL_OK")
</pallas_src>

<mosaic_0001>
module attributes {stable_mosaic.version = 11 : i64} {
  func.func @_policy_kernel(%arg0: i32, %arg1: memref<8x32xf32, #tpu.memory_space<vmem>>, %arg2: memref<8x32xf32, #tpu.memory_space<vmem>>, %arg3: memref<32x16xf32, #tpu.memory_space<vmem>>, %arg4: memref<1x16xf32, #tpu.memory_space<vmem>>, %arg5: memref<16x16xf32, #tpu.memory_space<vmem>>, %arg6: memref<1x16xf32, #tpu.memory_space<vmem>>, %arg7: memref<8x16xf32, #tpu.memory_space<vmem>>, %arg8: memref<8x16xf32, #tpu.memory_space<vmem>>) attributes {dimension_semantics = [#tpu.dimension_semantics<parallel>], iteration_bounds = array<i64: 1>, scalar_prefetch = 0 : i64, scratch_operands = 0 : i64, tpu.core_type = #tpu.core_type<tc>, window_params = [{transform_indices = @transform_0, window_bounds = array<i64: 8, 32>}, {transform_indices = @transform_1, window_bounds = array<i64: 8, 32>}, {pipeline_mode = #tpu.pipeline_mode<synchronous>, transform_indices = @transform_2, window_bounds = array<i64: 32, 16>}, {pipeline_mode = #tpu.pipeline_mode<synchronous>, transform_indices = @transform_3, window_bounds = array<i64: 1, 16>}, {pipeline_mode = #tpu.pipeline_mode<synchronous>, transform_indices = @transform_4, window_bounds = array<i64: 16, 16>}, {pipeline_mode = #tpu.pipeline_mode<synchronous>, transform_indices = @transform_5, window_bounds = array<i64: 1, 16>}, {transform_indices = @transform_6, window_bounds = array<i64: 8, 16>}, {transform_indices = @transform_7, window_bounds = array<i64: 8, 16>}]} {
    %c0 = arith.constant 0 : index
    %c0_0 = arith.constant 0 : index
    %0 = vector.load %arg1[%c0, %c0_0] : memref<8x32xf32, #tpu.memory_space<vmem>>, vector<8x32xf32>
    %c0_1 = arith.constant 0 : index
    %c0_2 = arith.constant 0 : index
    %1 = vector.load %arg2[%c0_1, %c0_2] : memref<8x32xf32, #tpu.memory_space<vmem>>, vector<8x32xf32>
    %2 = arith.mulf %0, %1 : vector<8x32xf32>
    %c0_3 = arith.constant 0 : index
    %c0_4 = arith.constant 0 : index
    %3 = vector.load %arg3[%c0_3, %c0_4] : memref<32x16xf32, #tpu.memory_space<vmem>>, vector<32x16xf32>
    %cst = arith.constant dense<0.000000e+00> : vector<8x16xf32>
    %4 = tpu.matmul %2, %3, %cst {dimension_numbers = #tpu.dot_dimension_numbers<[1], [0], [0], [1], [0, 0, 1, 1], [], []>} : vector<8x32xf32>, vector<32x16xf32>, vector<8x16xf32> -> vector<8x16xf32>
    %c0_5 = arith.constant 0 : index
    %c0_6 = arith.constant 0 : index
    %5 = vector.load %arg4[%c0_5, %c0_6] : memref<1x16xf32, #tpu.memory_space<vmem>>, vector<1x16xf32>
    %6 = vector.broadcast %5 : vector<1x16xf32> to vector<8x16xf32>
    %7 = arith.addf %4, %6 : vector<8x16xf32>
    %cst_7 = arith.constant dense<0xFF800000> : vector<8xf32>
    %8 = vector.multi_reduction <maximumf>, %7, %cst_7 [1] : vector<8x16xf32> to vector<8xf32>
    %9 = vector.shape_cast %8 : vector<8xf32> to vector<8x1xf32>
    %10 = vector.broadcast %9 : vector<8x1xf32> to vector<8x16xf32>
    %11 = arith.subf %7, %10 : vector<8x16xf32>
    %12 = math.exp %11 : vector<8x16xf32>
    %cst_8 = arith.constant dense<0.000000e+00> : vector<8xf32>
    %13 = vector.multi_reduction <add>, %12, %cst_8 [1] : vector<8x16xf32> to vector<8xf32>
    %14 = vector.shape_cast %13 : vector<8xf32> to vector<8x1xf32>
    %15 = vector.broadcast %14 : vector<8x1xf32> to vector<8x16xf32>
    %16 = arith.divf %12, %15 : vector<8x16xf32>
    %c0_9 = arith.constant 0 : index
    %c0_10 = arith.constant 0 : index
    %17 = vector.load %arg7[%c0_9, %c0_10] : memref<8x16xf32, #tpu.memory_space<vmem>>, vector<8x16xf32>
    tpu.vector_store %arg7[%c0_9, %c0_10], %16 {strides = array<i32>} : memref<8x16xf32, #tpu.memory_space<vmem>>, vector<8x16xf32>,
    %c0_11 = arith.constant 0 : index
    %c0_12 = arith.constant 0 : index
    %18 = vector.load %arg5[%c0_11, %c0_12] : memref<16x16xf32, #tpu.memory_space<vmem>>, vector<16x16xf32>
    %cst_13 = arith.constant dense<0.000000e+00> : vector<8x16xf32>
    %19 = tpu.matmul %7, %18, %cst_13 {dimension_numbers = #tpu.dot_dimension_numbers<[1], [0], [0], [1], [0, 0, 1, 1], [], []>} : vector<8x16xf32>, vector<16x16xf32>, vector<8x16xf32> -> vector<8x16xf32>
    %c0_14 = arith.constant 0 : index
    %c0_15 = arith.constant 0 : index
    %20 = vector.load %arg6[%c0_14, %c0_15] : memref<1x16xf32, #tpu.memory_space<vmem>>, vector<1x16xf32>
    %21 = vector.broadcast %20 : vector<1x16xf32> to vector<8x16xf32>
    %22 = arith.addf %19, %21 : vector<8x16xf32>
    %cst_16 = arith.constant -2.000000e+01 : f32
    %cst_17 = arith.constant 2.000000e+00 : f32
    %23 = vector.broadcast %cst_16 : f32 to vector<8x16xf32>
    %24 = arith.maximumf %23, %22 : vector<8x16xf32>
    %25 = vector.broadcast %cst_17 : f32 to vector<8x16xf32>
    %26 = arith.minimumf %25, %24 : vector<8x16xf32>
    %c0_18 = arith.constant 0 : index
    %c0_19 = arith.constant 0 : index
    %27 = vector.load %arg8[%c0_18, %c0_19] : memref<8x16xf32, #tpu.memory_space<vmem>>, vector<8x16xf32>
    tpu.vector_store %arg8[%c0_18, %c0_19], %26 {strides = array<i32>} : memref<8x16xf32, #tpu.memory_space<vmem>>, vector<8x16xf32>,
    return
  }
  func.func @transform_0(%arg0: i32) -> (i32, i32) {
    %c0_i32 = arith.constant 0 : i32
    %c0_i32_0 = arith.constant 0 : i32
    return %arg0, %c0_i32 : i32, i32
  }
  func.func @transform_1(%arg0: i32) -> (i32, i32) {
    %c0_i32 = arith.constant 0 : i32
    %c0_i32_0 = arith.constant 0 : i32
    return %arg0, %c0_i32 : i32, i32
  }
  func.func @transform_2(%arg0: i32) -> (i32, i32) {
    %c0_i32 = arith.constant 0 : i32
    %c0_i32_0 = arith.constant 0 : i32
    %c0_i32_1 = arith.constant 0 : i32
    return %c0_i32, %c0_i32_0 : i32, i32
  }
  func.func @transform_3(%arg0: i32) -> (i32, i32) {
    %c0_i32 = arith.constant 0 : i32
    %c0_i32_0 = arith.constant 0 : i32
    %c0_i32_1 = arith.constant 0 : i32
    return %c0_i32, %c0_i32_0 : i32, i32
  }
  func.func @transform_4(%arg0: i32) -> (i32, i32) {
    %c0_i32 = arith.constant 0 : i32
    %c0_i32_0 = arith.constant 0 : i32
    %c0_i32_1 = arith.constant 0 : i32
    return %c0_i32, %c0_i32_0 : i32, i32
  }
  func.func @transform_5(%arg0: i32) -> (i32, i32) {
    %c0_i32 = arith.constant 0 : i32
    %c0_i32_0 = arith.constant 0 : i32
    %c0_i32_1 = arith.constant 0 : i32
    return %c0_i32, %c0_i32_0 : i32, i32
  }
  func.func @transform_6(%arg0: i32) -> (i32, i32) {
    %c0_i32 = arith.constant 0 : i32
    %c0_i32_0 = arith.constant 0 : i32
    return %arg0, %c0_i32 : i32, i32
  }
  func.func @transform_7(%arg0: i32) -> (i32, i32) {
    %c0_i32 = arith.constant 0 : i32
    %c0_i32_0 = arith.constant 0 : i32
    return %arg0, %c0_i32 : i32, i32
  }
}

</mosaic_0001>

<llo_original>
// kernel: tpu_custom_call.1
$region0: #{tpu_custom_call.1}
  #allocation0 [shape = 'u32[]', space=smem, size = 0x4, offset = 0x4, fixed_abs, tag = 'smem constant byte address 0x4 - core index']
  #allocation1 [shape = 'u32[144,128]{1,0:T(1,128)}', space=vmem, size = 0x12000, scoped, tag = 'internal scratch']
  %s0 = inlined_call_operand.vmem [shape: f32[8,32], index: 0, kind: input, shape index: {}]
  %s1 = inlined_call_operand.vmem [shape: f32[8,32], index: 1, kind: input, shape index: {}]
  %s2 = inlined_call_operand.vmem [shape: f32[32,16], index: 2, kind: input, shape index: {}]
  %s3 = inlined_call_operand.vmem [shape: f32[1,16], index: 3, kind: input, shape index: {}]
  %s4 = inlined_call_operand.vmem [shape: f32[16,16], index: 4, kind: input, shape index: {}]
  %s5 = inlined_call_operand.vmem [shape: f32[1,16], index: 5, kind: input, shape index: {}]
  %s6 = inlined_call_operand.hbm [shape: f32[8,16], index: 6, kind: output, shape index: {0}]
  %s7 = inlined_call_operand.hbm [shape: f32[8,16], index: 7, kind: output, shape index: {1}]
  %8 = xla_tuple %s6, %s7
  %s9 = sld [smem:[#allocation0]]
  $region42: #{tpu_custom_call.1} parent=0
    _
  %s11 = ssub.s32 1, %s9
  %s12 = scalar_select 0, %s11, %s9
  $region1: #{tpu_custom_call.1} parent=0
    #allocation2 [shape = 'u8[4096]{0}', space=vmem, size = 0x1000, scoped, tag = 'output window, operand 0, single buffered']
    #allocation3 [shape = 's32[1]{0}', space=sflag, size = 0x4, scoped, tag = 'scoped memory for tpu_custom_call.1']
    #allocation4 [shape = 'u8[4096]{0}', space=vmem, size = 0x1000, scoped, tag = 'output window, operand 1, single buffered']
    #allocation5 [shape = 's32[1]{0}', space=sflag, size = 0x4, scoped, tag = 'scoped memory for tpu_custom_call.1']
    %13 = vsyncpa [#allocation3], 0
    %14 = vsyncpa [#allocation5], 0
    // Predicated region
    $region2: #{tpu_custom_call.1} parent=1 // pred_check
      _
    $region3: #{tpu_custom_call.1} parent=1 // pred_check_branch
      %16 = sbr.rel (0) target = $region5
    $region4: #{tpu_custom_call.1} parent=1 // pred_region
      _
    $region5: #{tpu_custom_call.1} parent=1 // pred_fallthru
      _
    // Predicated region
    $region6: #{tpu_custom_call.1} parent=1 // pred_check
      _
    $region7: #{tpu_custom_call.1} parent=1 // pred_check_branch
      %18 = sbr.rel (0) target = $region9
    $region8: #{tpu_custom_call.1} parent=1 // pred_region
      _
    $region9: #{tpu_custom_call.1} parent=1 // pred_fallthru
      _
    // Predicated region
    $region10: #{tpu_custom_call.1} parent=1 // pred_check
      _
    $region11: #{tpu_custom_call.1} parent=1 // pred_check_branch
      %20 = sbr.rel (0) target = $region13
    $region12: #{tpu_custom_call.1} parent=1 // pred_region
      _
    $region13: #{tpu_custom_call.1} parent=1 // pred_fallthru
      _
    // Predicated region
    $region14: #{tpu_custom_call.1} parent=1 // pred_check
      _
    $region15: #{tpu_custom_call.1} parent=1 // pred_check_branch
      %22 = sbr.rel (0) target = $region17
    $region16: #{tpu_custom_call.1} parent=1 // pred_region
      _
    $region17: #{tpu_custom_call.1} parent=1 // pred_fallthru
      _
    // Predicated region
    $region18: #{tpu_custom_call.1} parent=1 // pred_check
      _
    $region19: #{tpu_custom_call.1} parent=1 // pred_check_branch
      %24 = sbr.rel (0) target = $region21
    $region20: #{tpu_custom_call.1} parent=1 // pred_region
      _
    $region21: #{tpu_custom_call.1} parent=1 // pred_fallthru
      _
    // Predicated region
    $region22: #{tpu_custom_call.1} parent=1 // pred_check
      _
    $region23: #{tpu_custom_call.1} parent=1 // pred_check_branch
      %26 = sbr.rel (0) target = $region25
    $region24: #{tpu_custom_call.1} parent=1 // pred_region
      _
    $region25: #{tpu_custom_call.1} parent=1 // pred_fallthru
      _
    %v27 = vld [vmem:[%s0] sm:$0xff]
    %v28 = vld [vmem:[%s1] sm:$0xff]
    %v29 = vmul.f32 %v27, %v28
    %v30 = vld [vmem:[%s2] sm:$0xff]
    %v31 = vld [vmem:[%s2 + $0x8] sm:$0xff]
    %v32 = vld [vmem:[%s2 + $0x10] sm:$0xff]
    %v33 = vld [vmem:[%s2 + $0x18] sm:$0xff]
    %v34 = vld [vmem:[%s3] sm:$0x1]
    %v36 = vlaneseq
    %v37 = vshrl.u32 %v36, 7
    %v38 = vsub.s32 0, %v37
    %v39 = vrot.slane %v34, %v38
    %vm41 = vcmask 261120
    %v43 = vsel %vm41, %v29, 0
    %45 = vmatprep.subr.mxu0 0.0
    %46 = vmatpush1.msra.mxu0 %v30
    %47 = vmatprep.subr.mxu0 0.0
    %48 = vmatpush1.msra.mxu0 %v31
    %49 = vmatprep.subr.mxu0 0.0
    %50 = vmatpush1.msra.mxu0 %v32
    %51 = vmatprep.subr.mxu0 0.0
    %52 = vmatpush1.msra.mxu0 %v33
    %53 = vmatprep.subr.mxu0 0.0
    %54 = vmatpush1.msra.mxu0 0.0
    %55 = vmatprep.subr.mxu0 0.0
    %56 = vmatpush1.msra.mxu0 0.0
    %57 = vmatprep.subr.mxu0 0.0
    %58 = vmatpush1.msra.mxu0 0.0
    %59 = vmatprep.subr.mxu0 0.0
    %60 = vmatpush1.msra.mxu0 0.0
    %61 = vmatprep.subr.mxu0 0.0
    %62 = vmatpush1.msra.mxu0 0.0
    %63 = vmatprep.subr.mxu0 0.0
    %64 = vmatpush1.msra.mxu0 0.0
    %65 = vmatprep.subr.mxu0 0.0
    %66 = vmatpush1.msra.mxu0 0.0
    %67 = vmatprep.subr.mxu0 0.0
    %68 = vmatpush1.msra.mxu0 0.0
    %69 = vmatprep.subr.mxu0 0.0
    %70 = vmatpush1.msra.mxu0 0.0
    %71 = vmatprep.subr.mxu0 0.0
    %72 = vmatpush1.msra.mxu0 0.0
    %73 = vmatprep.subr.mxu0 0.0
    %74 = vmatpush1.msra.mxu0 0.0
    %75 = vmatprep.subr.mxu0 0.0
    %76 = vmatpush1.msra.mxu0 0.0
    %77 = vmatprep.subr.mxu0 0.0
    %78 = vmatpush1.msra.mxu0 0.0
    %79 = vmatprep.subr.mxu0 0.0
    %80 = vmatpush1.msra.mxu0 0.0
    %81 = vmatprep.subr.mxu0 0.0
    %82 = vmatpush1.msra.mxu0 0.0
    %83 = vmatprep.subr.mxu0 0.0
    %84 = vmatpush1.msra.mxu0 0.0
    %85 = vmatprep.subr.mxu0 0.0
    %86 = vmatpush1.msra.mxu0 0.0
    %87 = vmatprep.subr.mxu0 0.0
    %88 = vmatpush1.msra.mxu0 0.0
    %89 = vmatprep.subr.mxu0 0.0
    %90 = vmatpush1.msra.mxu0 0.0
    %91 = vmatprep.subr.mxu0 0.0
    %92 = vmatpush1.msra.mxu0 0.0
    %93 = vmatprep.subr.mxu0 0.0
    %94 = vmatpush1.msra.mxu0 0.0
    %95 = vmatprep.subr.mxu0 0.0
    %96 = vmatpush1.msra.mxu0 0.0
    %97 = vmatprep.subr.mxu0 0.0
    %98 = vmatpush1.msra.mxu0 0.0
    %99 = vmatprep.subr.mxu0 0.0
    %100 = vmatpush1.msra.mxu0 0.0
    %101 = vmatprep.subr.mxu0 0.0
    %102 = vmatpush1.msra.mxu0 0.0
    %103 = vmatprep.subr.mxu0 0.0
    %104 = vmatpush1.msra.mxu0 0.0
    %105 = vmatprep.subr.mxu0 0.0
    %106 = vmatpush1.msra.mxu0 0.0
    %107 = vmatprep.subr.mxu0 0.0
    %108 = vmatpush1.msra.mxu0 0.0
    %109 = vmatprep.mubr.f32.mxu0 0.0
    %110 = vmatmul.mubr.f32.gmra.mrb[0].mxu0 %v43
    %v111 = vpop.f32.mrb[0].mxu0
    %v112 = vadd.f32 %v39, %v111
    %v113 = vpop.f32.mrb[0].mxu0
    %114 = vdwg.mxu0
    %vm115 = vcmask 130048
    %v116 = vsel %vm115, %v112, -inf
    %117 = vmax.xlane.f32.xlu0 %v116
    %v118 = vpop.xlane.xlu0 %117
    %v119 = vsub.f32 %v112, %v118
    %v120 = vmul.f32 %v119, 1.442695
    %v121 = vpow.pop %v120
    %v122 = vsel %vm115, %v121, 0.0
    %123 = vadd.xlane.f32.xlu0 %v122
    %v124 = vpop.xlane.xlu0 %123
    %v125 = vrcp.pop %v124
    %v126 = vmul.f32 %v121, %v125
    %127 = vst.msk [vmem:[#allocation2] sm:$0xff] %vm115, %v126
    %v128 = vld [vmem:[%s4] sm:$0xff]
    %v129 = vld [vmem:[%s4 + $0x8] sm:$0xff]
    %v130 = vld [vmem:[%s5] sm:$0x1]
    %v132 = vlaneseq
    %v133 = vshrl.u32 %v132, 7
    %v134 = vsub.s32 0, %v133
    %v135 = vrot.slane %v130, %v134
    %v138 = vsel %vm115, %v112, 0
    %140 = vmatprep.subr.mxu0 0.0
    %141 = vmatpush1.msra.mxu0 %v128
    %142 = vmatprep.subr.mxu0 0.0
    %143 = vmatpush1.msra.mxu0 %v129
    %144 = vmatprep.subr.mxu0 0.0
    %145 = vmatpush1.msra.mxu0 0.0
    %146 = vmatprep.subr.mxu0 0.0
    %147 = vmatpush1.msra.mxu0 0.0
    %148 = vmatprep.subr.mxu0 0.0
    %149 = vmatpush1.msra.mxu0 0.0
    %150 = vmatprep.subr.mxu0 0.0
    %151 = vmatpush1.msra.mxu0 0.0
    %152 = vmatprep.subr.mxu0 0.0
    %153 = vmatpush1.msra.mxu0 0.0
    %154 = vmatprep.subr.mxu0 0.0
    %155 = vmatpush1.msra.mxu0 0.0
    %156 = vmatprep.subr.mxu0 0.0
    %157 = vmatpush1.msra.mxu0 0.0
    %158 = vmatprep.subr.mxu0 0.0
    %159 = vmatpush1.msra.mxu0 0.0
    %160 = vmatprep.subr.mxu0 0.0
    %161 = vmatpush1.msra.mxu0 0.0
    %162 = vmatprep.subr.mxu0 0.0
    %163 = vmatpush1.msra.mxu0 0.0
    %164 = vmatprep.subr.mxu0 0.0
    %165 = vmatpush1.msra.mxu0 0.0
    %166 = vmatprep.subr.mxu0 0.0
    %167 = vmatpush1.msra.mxu0 0.0
    %168 = vmatprep.subr.mxu0 0.0
    %169 = vmatpush1.msra.mxu0 0.0
    %170 = vmatprep.subr.mxu0 0.0
    %171 = vmatpush1.msra.mxu0 0.0
    %172 = vmatprep.subr.mxu0 0.0
    %173 = vmatpush1.msra.mxu0 0.0
    %174 = vmatprep.subr.mxu0 0.0
    %175 = vmatpush1.msra.mxu0 0.0
    %176 = vmatprep.subr.mxu0 0.0
    %177 = vmatpush1.msra.mxu0 0.0
    %178 = vmatprep.subr.mxu0 0.0
    %179 = vmatpush1.msra.mxu0 0.0
    %180 = vmatprep.subr.mxu0 0.0
    %181 = vmatpush1.msra.mxu0 0.0
    %182 = vmatprep.subr.mxu0 0.0
    %183 = vmatpush1.msra.mxu0 0.0
    %184 = vmatprep.subr.mxu0 0.0
    %185 = vmatpush1.msra.mxu0 0.0
    %186 = vmatprep.subr.mxu0 0.0
    %187 = vmatpush1.msra.mxu0 0.0
    %188 = vmatprep.subr.mxu0 0.0
    %189 = vmatpush1.msra.mxu0 0.0
    %190 = vmatprep.subr.mxu0 0.0
    %191 = vmatpush1.msra.mxu0 0.0
    %192 = vmatprep.subr.mxu0 0.0
    %193 = vmatpush1.msra.mxu0 0.0
    %194 = vmatprep.subr.mxu0 0.0
    %195 = vmatpush1.msra.mxu0 0.0
    %196 = vmatprep.subr.mxu0 0.0
    %197 = vmatpush1.msra.mxu0 0.0
    %198 = vmatprep.subr.mxu0 0.0
    %199 = vmatpush1.msra.mxu0 0.0
    %200 = vmatprep.subr.mxu0 0.0
    %201 = vmatpush1.msra.mxu0 0.0
    %202 = vmatprep.subr.mxu0 0.0
    %203 = vmatpush1.msra.mxu0 0.0
    %204 = vmatprep.mubr.f32.mxu0 0.0
    %205 = vmatmul.mubr.f32.gmra.mrb[0].mxu0 %v138
    %v206 = vpop.f32.mrb[0].mxu0
    %v207 = vadd.f32 %v135, %v206
    %v208 = vpop.f32.mrb[0].mxu0
    %209 = vdwg.mxu0
    %v210 = vmax.f32 %v207, -20.0
    %v211 = vmin.f32 %v210, 2.0
    %212 = vst.msk [vmem:[#allocation4] sm:$0xff] %vm115, %v211
    // Predicated region
    $region26: #{tpu_custom_call.1} parent=1 // pred_check
      _
    $region27: #{tpu_custom_call.1} parent=1 // pred_check_branch
      %214 = sbr.rel (0) target = $region29
    $region28: #{tpu_custom_call.1} parent=1 // pred_region
      %s216 = ssub.s32 128, 128
      %217 = vsyncadd [#allocation3], %s216
      %s219 = sshll.u32 [#allocation2], 4
      %s220 = int_to_ptr.vmem [resolvable:$true] %s219
      %222 = dma.vmem_to_hbm [thread:$0]  %s220, 128, %s6, [#allocation3]
    $region29: #{tpu_custom_call.1} parent=1 // pred_fallthru
      _
    // Predicated region
    $region30: #{tpu_custom_call.1} parent=1 // pred_check
      _
    $region31: #{tpu_custom_call.1} parent=1 // pred_check_branch
      %224 = sbr.rel (0) target = $region33
    $region32: #{tpu_custom_call.1} parent=1 // pred_region
      %s226 = ssub.s32 128, 128
      %227 = vsyncadd [#allocation5], %s226
      %s229 = sshll.u32 [#allocation4], 4
      %s230 = int_to_ptr.vmem [resolvable:$true] %s229
      %232 = dma.vmem_to_hbm [thread:$0]  %s230, 128, %s7, [#allocation5]
    $region33: #{tpu_custom_call.1} parent=1 // pred_fallthru
      _
    // Predicated region
    $region34: #{tpu_custom_call.1} parent=1 // pred_check
      _
    $region35: #{tpu_custom_call.1} parent=1 // pred_check_branch
      %234 = sbr.rel (0) target = $region37
    $region36: #{tpu_custom_call.1} parent=1 // pred_region
      %235 = dma.done [#allocation3], 128
    $region37: #{tpu_custom_call.1} parent=1 // pred_fallthru
      _
    // Predicated region
    $region38: #{tpu_custom_call.1} parent=1 // pred_check
      _
    $region39: #{tpu_custom_call.1} parent=1 // pred_check_branch
      %237 = sbr.rel (0) target = $region41
    $region40: #{tpu_custom_call.1} parent=1 // pred_region
      %238 = dma.done [#allocation5], 128
    $region41: #{tpu_custom_call.1} parent=1 // pred_fallthru
      _
    %239 = vsyncpa [#allocation3], 1
    %240 = vsyncpa [#allocation5], 1

</llo_original>
